<compile_context>
chip_gen: v7x
topology: tpu7x:2x2x1
jax: 0.10.0
libtpu: 0.0.40
codegen_flags: <defaults>
</compile_context>

<pallas_src>
import functools

import numpy as np
import jax
import jax.numpy as jnp
from jax.experimental import pallas as pl
from jax.experimental.pallas import tpu as pltpu


# ----------------------------------------------------------------------------
# Kernel
# ----------------------------------------------------------------------------
def generic_block_kernel(x_ref,
                         w1_ref, b1_ref, w2_ref, b2_ref,
                         w3_ref, b3_ref, w4_ref, b4_ref,
                         wh_ref, bh_ref,
                         out_ref):
    """Feature-major GenericBlock body.

    All activations are (feature, batch_tile) so batch is on the 128-lane axis.
    Weights are (out_features, in_features).  MXU operands are in
    `compute_dtype` (bf16 by default); bias-add / ReLU / accumulation in f32.
    """
    cdt = x_ref.dtype
    h = x_ref[...]                                              # (L, TB)

    # fc1..fc4 with ReLU.
    for w_ref, b_ref in ((w1_ref, b1_ref), (w2_ref, b2_ref),
                         (w3_ref, b3_ref), (w4_ref, b4_ref)):
        acc = jnp.dot(w_ref[...], h, preferred_element_type=jnp.float32)
        h = jnp.maximum(acc + b_ref[...], 0.0).astype(cdt)

    # Folded heads: rows [0:L] = backcast, rows [L:L+F] = forecast.
    out = jnp.dot(wh_ref[...], h, preferred_element_type=jnp.float32) + bh_ref[...]
    out_ref[...] = out.astype(out_ref.dtype)


# ----------------------------------------------------------------------------
# Offline weight preparation (call ONCE, reuse across forward calls)
# ----------------------------------------------------------------------------
def prepare_generic_block(p, *, compute_dtype=jnp.bfloat16):
    """Transpose weights to (out, in), fold theta projections into the heads,
    stack both heads into one (L + F, units) weight and one (L + F, 1) bias."""
    cd = compute_dtype
    units = p["w1"].shape[1]
    L = p["wbc"].shape[1]
    F = p["wfc"].shape[1]

    def col(b):                         # bias (1, N) -> f32 column (N, 1)
        return b.reshape(-1, 1).astype(jnp.float32)

    # backcast = (h @ wtb) @ wbc + bbc == h @ (wtb @ wbc) + bbc  (fold in f32)
    wb = (p["wtb"] @ p["wbc"]).T        # (L, units)
    wf = (p["wtf"] @ p["wfc"]).T        # (F, units)
    wh = jnp.concatenate([wb, wf], axis=0).astype(cd)           # (L + F, units)
    bh = jnp.concatenate([col(p["bbc"]), col(p["bfc"])], axis=0)  # (L + F, 1)

    weights = (
        p["w1"].T.astype(cd), col(p["b1"]),
        p["w2"].T.astype(cd), col(p["b2"]),
        p["w3"].T.astype(cd), col(p["b3"]),
        p["w4"].T.astype(cd), col(p["b4"]),
        wh, bh,
    )
    dims = {"units": units, "backcast_length": L, "forecast_length": F,
            "compute_dtype": cd}
    return weights, dims


# ----------------------------------------------------------------------------
# Helpers
# ----------------------------------------------------------------------------
@functools.cache
def _const_operand_pipeline_mode():
    """pl.Buffered(1) for grid-constant weights: constant index_map means no
    re-DMA across grid steps, so double buffering is pure VMEM waste.
    Probed once on a tiny kernel; falls back to the default if unsupported."""
    try:
        mode = pl.Buffered(1)

        def _probe_kernel(x_ref, o_ref):
            o_ref[...] = x_ref[...]

        probe = pl.pallas_call(
            _probe_kernel,
            out_shape=jax.ShapeDtypeStruct((8, 128), jnp.float32),
            grid=(2,),
            in_specs=[pl.BlockSpec((8, 128), lambda i: (0, 0),
                                   pipeline_mode=mode)],
            out_specs=pl.BlockSpec((8, 128), lambda i: (0, 0)),
        )
        x_probe = jnp.arange(8 * 128, dtype=jnp.float32).reshape(8, 128)
        y_probe = jax.jit(probe)(x_probe)
        if not bool(jnp.allclose(y_probe, x_probe)):
            return None
        return mode
    except Exception:
        return None


def _pick_batch_tile(Bp, tb):
    """Largest lane-multiple tile dividing Bp, <= tb, and (when Bp >= 256)
    leaving >= 2 grid steps so both v7x TensorCores get work."""
    best = 128
    t = 128
    upper = min(tb, Bp)
    while t <= upper:
        if Bp % t == 0 and not (Bp >= 256 and Bp // t < 2):
            best = t
        t += 128
    return best


# ----------------------------------------------------------------------------
# Forward
# ----------------------------------------------------------------------------
def generic_block_apply(xT, prepared, *, tb=2048, out_dtype=jnp.float32):
    """Feature-major forward (no HBM transposes — use this when the whole
    N-BEATS stack is kept feature-major).

    xT: (backcast_length, Bp) with Bp % 128 == 0 (batch on lanes, padded).
    Returns a (backcast_length + forecast_length, Bp) slab:
      rows [0:L] = backcast, rows [L:L+F] = forecast.
    """
    weights, dims = prepared
    L = dims["backcast_length"]
    F = dims["forecast_length"]
    cd = dims["compute_dtype"]
    Lx, Bp = xT.shape
    assert Lx == L, "backcast_length mismatch between x and params"
    assert Bp % 128 == 0, "padded batch must be a multiple of 128 lanes"
    assert tb % 128 == 0, "batch tile must be a lane multiple"

    tile = _pick_batch_tile(Bp, tb)
    n_tiles = Bp // tile
    mode = _const_operand_pipeline_mode()

    def const_spec(arr):
        if mode is None:
            return pl.BlockSpec(arr.shape, lambda i: (0, 0))
        return pl.BlockSpec(arr.shape, lambda i: (0, 0), pipeline_mode=mode)

    in_specs = [pl.BlockSpec((L, tile), lambda i: (0, i))]
    in_specs += [const_spec(w) for w in weights]

    # VMEM budget: weights (single- or double-buffered) + streamed x/out tiles
    # + in-kernel f32 accumulator / compute-dtype activation temporaries.
    cd_bytes = weights[0].dtype.itemsize
    out_bytes = np.dtype(out_dtype).itemsize
    units = weights[2].shape[0]
    w_bytes = sum(int(w.size) * w.dtype.itemsize for w in weights)
    est = ((1 if mode is not None else 2) * w_bytes
           + 2 * (L * tile * cd_bytes + (L + F) * tile * out_bytes)
           + 2 * units * tile * (4 + cd_bytes)
           + (4 << 20))
    vmem_limit = int(min(max(est, 32 << 20), 60 << 20))   # <= v7x 64 MiB physical

    fn = pl.pallas_call(
        generic_block_kernel,
        out_shape=jax.ShapeDtypeStruct((L + F, Bp), out_dtype),
        grid_spec=pltpu.PrefetchScalarGridSpec(
            num_scalar_prefetch=0,
            grid=(n_tiles,),
            in_specs=in_specs,
            out_specs=pl.BlockSpec((L + F, tile), lambda i: (0, i)),
        ),
        compiler_params=pltpu.CompilerParams(
            dimension_semantics=("parallel",),
            vmem_limit_bytes=vmem_limit),
    )
    return fn(xT.astype(cd), *weights)


def generic_block_forward(x, prepared, *, tb=2048, out_dtype=jnp.float32):
    """Batch-major wrapper matching GenericBlock.forward.

    x: (B, backcast_length) or (B, backcast_length, 1).
    Returns (backcast (B, L), forecast (B, F)).
    Pays one boundary transpose each way; inside an N-BEATS stack prefer
    generic_block_apply to stay feature-major end-to-end.
    """
    # TODO(synk): fuse the N-BEATS residual (x - backcast) into the kernel
    # epilogue when stacking multiple blocks feature-major.
    if x.ndim == 3 and x.shape[-1] == 1:          # squeeze_last_dim
        x = x[..., 0]
    B, L = x.shape
    _, dims = prepared
    assert L == dims["backcast_length"]

    Bp = ((B + 127) // 128) * 128
    xT = jnp.pad(x.astype(jnp.float32), ((0, Bp - B), (0, 0))).T   # (L, Bp)

    out = generic_block_apply(xT, prepared, tb=tb, out_dtype=out_dtype)

    backcast = out[:L, :B].T.astype(jnp.float32)   # (B, L)
    forecast = out[L:, :B].T.astype(jnp.float32)   # (B, F)
    return backcast, forecast


# ----------------------------------------------------------------------------
# Synthetic params + pure-JAX reference
# ----------------------------------------------------------------------------
def init_params(key, *, units, thetas_dim, backcast_length, forecast_length):
    """Deterministic synthetic weights. Linear weights stored as (in, out)."""
    ks = jax.random.split(key, 14)

    def w(k, shape, fan_in):
        bound = 1.0 / jnp.sqrt(float(fan_in))
        return jax.random.uniform(k, shape, jnp.float32, -bound, bound)

    return {
        "w1": w(ks[0], (backcast_length, units), backcast_length),
        "b1": w(ks[1], (1, units), backcast_length),
        "w2": w(ks[2], (units, units), units),
        "b2": w(ks[3], (1, units), units),
        "w3": w(ks[4], (units, units), units),
        "b3": w(ks[5], (1, units), units),
        "w4": w(ks[6], (units, units), units),
        "b4": w(ks[7], (1, units), units),
        "wtb": w(ks[8], (units, thetas_dim), units),      # bias=False
        "wtf": w(ks[9], (units, thetas_dim), units),      # bias=False
        "wbc": w(ks[10], (thetas_dim, backcast_length), thetas_dim),
        "bbc": w(ks[11], (1, backcast_length), thetas_dim),
        "wfc": w(ks[12], (thetas_dim, forecast_length), thetas_dim),
        "bfc": w(ks[13], (1, forecast_length), thetas_dim),
    }


def reference_forward(x, p):
    if x.ndim == 3 and x.shape[-1] == 1:
        x = x[..., 0]
    h = jax.nn.relu(x @ p["w1"] + p["b1"])
    h = jax.nn.relu(h @ p["w2"] + p["b2"])
    h = jax.nn.relu(h @ p["w3"] + p["b3"])
    h = jax.nn.relu(h @ p["w4"] + p["b4"])
    tb = h @ p["wtb"]
    tf = h @ p["wtf"]
    return tb @ p["wbc"] + p["bbc"], tf @ p["wfc"] + p["bfc"]


if __name__ == "__main__":
    # Small shapes consistent with the module defaults.
    B = 16
    backcast_length = 10
    forecast_length = 5
    units = 32
    thetas_dim = 8

    key = jax.random.PRNGKey(0)
    k_x, k_p = jax.random.split(key)

    # (B, backcast_length, 1) to exercise squeeze_last_dim.
    x = jax.random.normal(k_x, (B, backcast_length, 1), jnp.float32)
    params = init_params(k_p, units=units, thetas_dim=thetas_dim,
                         backcast_length=backcast_length,
                         forecast_length=forecast_length)

    ref_b, ref_f = reference_forward(x, params)

    # f32 MXU path: matches the reference up to fp reassociation (folded heads).
    prep_f32 = prepare_generic_block(params, compute_dtype=jnp.float32)
    b_f32, f_f32 = generic_block_forward(x, prep_f32)
    jax.block_until_ready((b_f32, f_f32))
    assert b_f32.shape == (B, backcast_length)
    assert f_f32.shape == (B, forecast_length)
    assert jnp.allclose(b_f32, ref_b, atol=1e-4, rtol=1e-4)
    assert jnp.allclose(f_f32, ref_f, atol=1e-4, rtol=1e-4)

    # Default bf16 MXU path (documented precision tradeoff; elementwise in f32).
    prep_bf16 = prepare_generic_block(params)            # compute_dtype=bf16
    b_b16, f_b16 = generic_block_forward(x, prep_bf16)
    jax.block_until_ready((b_b16, f_b16))
    assert jnp.allclose(b_b16, ref_b, atol=1e-1, rtol=1e-1)
    assert jnp.allclose(f_b16, ref_f, atol=1e-1, rtol=1e-1)

    print("KERNEL_OK")
</pallas_src>

<mosaic_0001>
module attributes {stable_mosaic.version = 11 : i64} {
  func.func @_probe_kernel(%arg0: i32, %arg1: memref<8x128xf32, #tpu.memory_space<vmem>>, %arg2: memref<8x128xf32, #tpu.memory_space<vmem>>) attributes {dimension_semantics = [#tpu.dimension_semantics<arbitrary>], iteration_bounds = array<i64: 2>, scalar_prefetch = 0 : i64, scratch_operands = 0 : i64, tpu.core_type = #tpu.core_type<tc>, window_params = [{pipeline_mode = #tpu.pipeline_mode<synchronous>, transform_indices = @transform_0, window_bounds = array<i64: 8, 128>}, {pipeline_mode = #tpu.pipeline_mode<synchronous>, transform_indices = @transform_1, window_bounds = array<i64: 8, 128>}]} {
    %c0 = arith.constant 0 : index
    %c0_0 = arith.constant 0 : index
    %0 = vector.load %arg1[%c0, %c0_0] : memref<8x128xf32, #tpu.memory_space<vmem>>, vector<8x128xf32>
    %c0_1 = arith.constant 0 : index
    %c0_2 = arith.constant 0 : index
    %1 = vector.load %arg2[%c0_1, %c0_2] : memref<8x128xf32, #tpu.memory_space<vmem>>, vector<8x128xf32>
    tpu.vector_store %arg2[%c0_1, %c0_2], %0 {strides = array<i32>} : memref<8x128xf32, #tpu.memory_space<vmem>>, vector<8x128xf32>,
    return
  }
  func.func @transform_0(%arg0: i32) -> (i32, i32) {
    %c0_i32 = arith.constant 0 : i32
    %c0_i32_0 = arith.constant 0 : i32
    %c0_i32_1 = arith.constant 0 : i32
    return %c0_i32, %c0_i32_0 : i32, i32
  }
  func.func @transform_1(%arg0: i32) -> (i32, i32) {
    %c0_i32 = arith.constant 0 : i32
    %c0_i32_0 = arith.constant 0 : i32
    %c0_i32_1 = arith.constant 0 : i32
    return %c0_i32, %c0_i32_0 : i32, i32
  }
}

module attributes {stable_mosaic.version = 11 : i64} {
  func.func @generic_block_kernel(%arg0: i32, %arg1: memref<10x128xf32, #tpu.memory_space<vmem>>, %arg2: memref<32x10xf32, #tpu.memory_space<vmem>>, %arg3: memref<32x1xf32, #tpu.memory_space<vmem>>, %arg4: memref<32x32xf32, #tpu.memory_space<vmem>>, %arg5: memref<32x1xf32, #tpu.memory_space<vmem>>, %arg6: memref<32x32xf32, #tpu.memory_space<vmem>>, %arg7: memref<32x1xf32, #tpu.memory_space<vmem>>, %arg8: memref<32x32xf32, #tpu.memory_space<vmem>>, %arg9: memref<32x1xf32, #tpu.memory_space<vmem>>, %arg10: memref<15x32xf32, #tpu.memory_space<vmem>>, %arg11: memref<15x1xf32, #tpu.memory_space<vmem>>, %arg12: memref<15x128xf32, #tpu.memory_space<vmem>>) attributes {dimension_semantics = [#tpu.dimension_semantics<parallel>], iteration_bounds = array<i64: 1>, scalar_prefetch = 0 : i64, scratch_operands = 0 : i64, tpu.core_type = #tpu.core_type<tc>, window_params = [{transform_indices = @transform_0, window_bounds = array<i64: 10, 128>}, {pipeline_mode = #tpu.pipeline_mode<synchronous>, transform_indices = @transform_1, window_bounds = array<i64: 32, 10>}, {pipeline_mode = #tpu.pipeline_mode<synchronous>, transform_indices = @transform_2, window_bounds = array<i64: 32, 1>}, {pipeline_mode = #tpu.pipeline_mode<synchronous>, transform_indices = @transform_3, window_bounds = array<i64: 32, 32>}, {pipeline_mode = #tpu.pipeline_mode<synchronous>, transform_indices = @transform_4, window_bounds = array<i64: 32, 1>}, {pipeline_mode = #tpu.pipeline_mode<synchronous>, transform_indices = @transform_5, window_bounds = array<i64: 32, 32>}, {pipeline_mode = #tpu.pipeline_mode<synchronous>, transform_indices = @transform_6, window_bounds = array<i64: 32, 1>}, {pipeline_mode = #tpu.pipeline_mode<synchronous>, transform_indices = @transform_7, window_bounds = array<i64: 32, 32>}, {pipeline_mode = #tpu.pipeline_mode<synchronous>, transform_indices = @transform_8, window_bounds = array<i64: 32, 1>}, {pipeline_mode = #tpu.pipeline_mode<synchronous>, transform_indices = @transform_9, window_bounds = array<i64: 15, 32>}, {pipeline_mode = #tpu.pipeline_mode<synchronous>, transform_indices = @transform_10, window_bounds = array<i64: 15, 1>}, {transform_indices = @transform_11, window_bounds = array<i64: 15, 128>}]} {
    %c0 = arith.constant 0 : index
    %c0_0 = arith.constant 0 : index
    %0 = vector.load %arg1[%c0, %c0_0] : memref<10x128xf32, #tpu.memory_space<vmem>>, vector<10x128xf32>
    %c0_1 = arith.constant 0 : index
    %c0_2 = arith.constant 0 : index
    %1 = vector.load %arg2[%c0_1, %c0_2] : memref<32x10xf32, #tpu.memory_space<vmem>>, vector<32x10xf32>
    %cst = arith.constant dense<0.000000e+00> : vector<32x128xf32>
    %2 = tpu.matmul %1, %0, %cst {dimension_numbers = #tpu.dot_dimension_numbers<[1], [0], [0], [1], [0, 0, 1, 1], [], []>} : vector<32x10xf32>, vector<10x128xf32>, vector<32x128xf32> -> vector<32x128xf32>
    %c0_3 = arith.constant 0 : index
    %c0_4 = arith.constant 0 : index
    %3 = vector.load %arg3[%c0_3, %c0_4] : memref<32x1xf32, #tpu.memory_space<vmem>>, vector<32x1xf32>
    %4 = vector.broadcast %3 : vector<32x1xf32> to vector<32x128xf32>
    %5 = arith.addf %2, %4 : vector<32x128xf32>
    %cst_5 = arith.constant 0.000000e+00 : f32
    %6 = vector.broadcast %cst_5 : f32 to vector<32x128xf32>
    %7 = arith.maximumf %5, %6 : vector<32x128xf32>
    %c0_6 = arith.constant 0 : index
    %c0_7 = arith.constant 0 : index
    %8 = vector.load %arg4[%c0_6, %c0_7] : memref<32x32xf32, #tpu.memory_space<vmem>>, vector<32x32xf32>
    %cst_8 = arith.constant dense<0.000000e+00> : vector<32x128xf32>
    %9 = tpu.matmul %8, %7, %cst_8 {dimension_numbers = #tpu.dot_dimension_numbers<[1], [0], [0], [1], [0, 0, 1, 1], [], []>} : vector<32x32xf32>, vector<32x128xf32>, vector<32x128xf32> -> vector<32x128xf32>
    %c0_9 = arith.constant 0 : index
    %c0_10 = arith.constant 0 : index
    %10 = vector.load %arg5[%c0_9, %c0_10] : memref<32x1xf32, #tpu.memory_space<vmem>>, vector<32x1xf32>
    %11 = vector.broadcast %10 : vector<32x1xf32> to vector<32x128xf32>
    %12 = arith.addf %9, %11 : vector<32x128xf32>
    %cst_11 = arith.constant 0.000000e+00 : f32
    %13 = vector.broadcast %cst_11 : f32 to vector<32x128xf32>
    %14 = arith.maximumf %12, %13 : vector<32x128xf32>
    %c0_12 = arith.constant 0 : index
    %c0_13 = arith.constant 0 : index
    %15 = vector.load %arg6[%c0_12, %c0_13] : memref<32x32xf32, #tpu.memory_space<vmem>>, vector<32x32xf32>
    %cst_14 = arith.constant dense<0.000000e+00> : vector<32x128xf32>
    %16 = tpu.matmul %15, %14, %cst_14 {dimension_numbers = #tpu.dot_dimension_numbers<[1], [0], [0], [1], [0, 0, 1, 1], [], []>} : vector<32x32xf32>, vector<32x128xf32>, vector<32x128xf32> -> vector<32x128xf32>
    %c0_15 = arith.constant 0 : index
    %c0_16 = arith.constant 0 : index
    %17 = vector.load %arg7[%c0_15, %c0_16] : memref<32x1xf32, #tpu.memory_space<vmem>>, vector<32x1xf32>
    %18 = vector.broadcast %17 : vector<32x1xf32> to vector<32x128xf32>
    %19 = arith.addf %16, %18 : vector<32x128xf32>
    %cst_17 = arith.constant 0.000000e+00 : f32
    %20 = vector.broadcast %cst_17 : f32 to vector<32x128xf32>
    %21 = arith.maximumf %19, %20 : vector<32x128xf32>
    %c0_18 = arith.constant 0 : index
    %c0_19 = arith.constant 0 : index
    %22 = vector.load %arg8[%c0_18, %c0_19] : memref<32x32xf32, #tpu.memory_space<vmem>>, vector<32x32xf32>
    %cst_20 = arith.constant dense<0.000000e+00> : vector<32x128xf32>
    %23 = tpu.matmul %22, %21, %cst_20 {dimension_numbers = #tpu.dot_dimension_numbers<[1], [0], [0], [1], [0, 0, 1, 1], [], []>} : vector<32x32xf32>, vector<32x128xf32>, vector<32x128xf32> -> vector<32x128xf32>
    %c0_21 = arith.constant 0 : index
    %c0_22 = arith.constant 0 : index
    %24 = vector.load %arg9[%c0_21, %c0_22] : memref<32x1xf32, #tpu.memory_space<vmem>>, vector<32x1xf32>
    %25 = vector.broadcast %24 : vector<32x1xf32> to vector<32x128xf32>
    %26 = arith.addf %23, %25 : vector<32x128xf32>
    %cst_23 = arith.constant 0.000000e+00 : f32
    %27 = vector.broadcast %cst_23 : f32 to vector<32x128xf32>
    %28 = arith.maximumf %26, %27 : vector<32x128xf32>
    %c0_24 = arith.constant 0 : index
    %c0_25 = arith.constant 0 : index
    %29 = vector.load %arg10[%c0_24, %c0_25] : memref<15x32xf32, #tpu.memory_space<vmem>>, vector<15x32xf32>
    %cst_26 = arith.constant dense<0.000000e+00> : vector<15x128xf32>
    %30 = tpu.matmul %29, %28, %cst_26 {dimension_numbers = #tpu.dot_dimension_numbers<[1], [0], [0], [1], [0, 0, 1, 1], [], []>} : vector<15x32xf32>, vector<32x128xf32>, vector<15x128xf32> -> vector<15x128xf32>
    %c0_27 = arith.constant 0 : index
    %c0_28 = arith.constant 0 : index
    %31 = vector.load %arg11[%c0_27, %c0_28] : memref<15x1xf32, #tpu.memory_space<vmem>>, vector<15x1xf32>
    %32 = vector.broadcast %31 : vector<15x1xf32> to vector<15x128xf32>
    %33 = arith.addf %30, %32 : vector<15x128xf32>
    %c0_29 = arith.constant 0 : index
    %c0_30 = arith.constant 0 : index
    %34 = vector.load %arg12[%c0_29, %c0_30] : memref<15x128xf32, #tpu.memory_space<vmem>>, vector<15x128xf32>
    tpu.vector_store %arg12[%c0_29, %c0_30], %33 {strides = array<i32>} : memref<15x128xf32, #tpu.memory_space<vmem>>, vector<15x128xf32>,
    return
  }
  func.func @transform_0(%arg0: i32) -> (i32, i32) {
    %c0_i32 = arith.constant 0 : i32
    %c0_i32_0 = arith.constant 0 : i32
    return %c0_i32, %arg0 : i32, i32
  }
  func.func @transform_1(%arg0: i32) -> (i32, i32) {
    %c0_i32 = arith.constant 0 : i32
    %c0_i32_0 = arith.constant 0 : i32
    %c0_i32_1 = arith.constant 0 : i32
    return %c0_i32, %c0_i32_0 : i32, i32
  }
  func.func @transform_2(%arg0: i32) -> (i32, i32) {
    %c0_i32 = arith.constant 0 : i32
    %c0_i32_0 = arith.constant 0 : i32
    %c0_i32_1 = arith.constant 0 : i32
    return %c0_i32, %c0_i32_0 : i32, i32
  }
  func.func @transform_3(%arg0: i32) -> (i32, i32) {
    %c0_i32 = arith.constant 0 : i32
    %c0_i32_0 = arith.constant 0 : i32
    %c0_i32_1 = arith.constant 0 : i32
    return %c0_i32, %c0_i32_0 : i32, i32
  }
  func.func @transform_4(%arg0: i32) -> (i32, i32) {
    %c0_i32 = arith.constant 0 : i32
    %c0_i32_0 = arith.constant 0 : i32
    %c0_i32_1 = arith.constant 0 : i32
    return %c0_i32, %c0_i32_0 : i32, i32
  }
  func.func @transform_5(%arg0: i32) -> (i32, i32) {
    %c0_i32 = arith.constant 0 : i32
    %c0_i32_0 = arith.constant 0 : i32
    %c0_i32_1 = arith.constant 0 : i32
    return %c0_i32, %c0_i32_0 : i32, i32
  }
  func.func @transform_6(%arg0: i32) -> (i32, i32) {
    %c0_i32 = arith.constant 0 : i32
    %c0_i32_0 = arith.constant 0 : i32
    %c0_i32_1 = arith.constant 0 : i32
    return %c0_i32, %c0_i32_0 : i32, i32
  }
  func.func @transform_7(%arg0: i32) -> (i32, i32) {
    %c0_i32 = arith.constant 0 : i32
    %c0_i32_0 = arith.constant 0 : i32
    %c0_i32_1 = arith.constant 0 : i32
    return %c0_i32, %c0_i32_0 : i32, i32
  }
  func.func @transform_8(%arg0: i32) -> (i32, i32) {
    %c0_i32 = arith.constant 0 : i32
    %c0_i32_0 = arith.constant 0 : i32
    %c0_i32_1 = arith.constant 0 : i32
    return %c0_i32, %c0_i32_0 : i32, i32
  }
  func.func @transform_9(%arg0: i32) -> (i32, i32) {
    %c0_i32 = arith.constant 0 : i32
    %c0_i32_0 = arith.constant 0 : i32
    %c0_i32_1 = arith.constant 0 : i32
    return %c0_i32, %c0_i32_0 : i32, i32
  }
  func.func @transform_10(%arg0: i32) -> (i32, i32) {
    %c0_i32 = arith.constant 0 : i32
    %c0_i32_0 = arith.constant 0 : i32
    %c0_i32_1 = arith.constant 0 : i32
    return %c0_i32, %c0_i32_0 : i32, i32
  }
  func.func @transform_11(%arg0: i32) -> (i32, i32) {
    %c0_i32 = arith.constant 0 : i32
    %c0_i32_0 = arith.constant 0 : i32
    return %c0_i32, %arg0 : i32, i32
  }
}

</mosaic_0001>

<llo_original>
// kernel: tpu_custom_call.1
$region0: #{tpu_custom_call.1}
  #allocation0 [shape = 'u32[]', space=smem, size = 0x4, offset = 0x4, fixed_abs, tag = 'smem constant byte address 0x4 - core index']
  #allocation1 [shape = 'u32[144,128]{1,0:T(1,128)}', space=vmem, size = 0x12000, scoped, tag = 'internal scratch']
  %s0 = inlined_call_operand.hbm [shape: f32[8,128], index: 0, kind: input, shape index: {}]
  %s1 = inlined_call_operand.hbm [shape: f32[8,128], index: 1, kind: output, shape index: {}]
  %s2 = sld [smem:[#allocation0]]
  $region41: #{tpu_custom_call.1} parent=0
    _
  %s4 = ssub.s32 1, %s2
  %s5 = scalar_select 0, %s4, %s2
  $region1: #{tpu_custom_call.1} parent=0
    #allocation2 [shape = 'u8[4096]{0}', space=vmem, size = 0x1000, scoped, tag = 'input window, operand 0, single buffered']
    #allocation3 [shape = 's32[2]{0}', space=sflag, size = 0x8, scoped, tag = 'scoped memory for tpu_custom_call.1']
    #allocation4 [shape = 's32[2]{0}', space=sflag, size = 0x8, scoped, tag = 'scoped memory for tpu_custom_call.1']
    #allocation5 [shape = 'u8[4096]{0}', space=vmem, size = 0x1000, scoped, tag = 'output window, operand 0, single buffered']
    %6 = vsyncpa [#allocation3], 0
    %7 = vsyncpa [#allocation4], 0
    loop: start=0, step=1, limit=4
    $region2: #{tpu_custom_call.1} parent=1 // loop_pre_header
      _
    $region3: #{tpu_custom_call.1} parent=1 // loop_header
      %s9 = sphi 0, %s13
      %p10 = scmp.ge.s32.totalorder %s9, 4
      %s17 = sphi 0, %s17
      %s19 = sphi 0, %s17
      %s20 = sphi 0, %s19
      %s34 = sphi 0, %s20
      %s38 = sphi 0, %s38
      %s40 = sphi 0, %s38
      %s41 = sphi 0, %s40
      %s55 = sphi 0, %s41
    $region4: #{tpu_custom_call.1} parent=1 // loop_header_branch
      %12 = sbr.rel (%p10) target = $region8
    $region5: #{tpu_custom_call.1} parent=1 // loop_body
      %s14 = ssub.s32 %s9, 1
      %s15 = ssub.s32 %s9, 2
      %s16 = sadd.s32 %s9, 1
      %s18 = sadd.s32 %s17, 1
      %p21 = scmp.eq.s32.totalorder %s9, 1
      %p22 = scmp.ne.s32.totalorder %s17, %s19
      %p23 = scmp.eq.s32.totalorder %s9, 0
      %p24 = por %p22, %p23
      %p25 = scmp.ne.s32.totalorder %s17, %s19
      %p26 = scmp.eq.s32.totalorder %s14, 1
      %p27 = por %p25, %p26
      %p28 = scmp.ne.s32.totalorder %s19, %s20
      %p29 = scmp.eq.s32.totalorder %s14, 0
      %p30 = por %p28, %p29
      %p31 = scmp.ne.s32.totalorder %s19, %s20
      %p32 = scmp.eq.s32.totalorder %s15, 1
      %p33 = por %p31, %p32
      %p35 = scmp.ne.s32.totalorder %s20, %s34
      %p36 = scmp.eq.s32.totalorder %s15, 0
      %p37 = por %p35, %p36
      %s39 = sadd.s32 %s38, 1
      %p42 = scmp.eq.s32.totalorder %s9, 1
      %p43 = scmp.ne.s32.totalorder %s38, %s40
      %p44 = scmp.eq.s32.totalorder %s9, 0
      %p45 = por %p43, %p44
      %p46 = scmp.ne.s32.totalorder %s38, %s40
      %p47 = scmp.eq.s32.totalorder %s14, 1
      %p48 = por %p46, %p47
      %p49 = scmp.ne.s32.totalorder %s40, %s41
      %p50 = scmp.eq.s32.totalorder %s14, 0
      %p51 = por %p49, %p50
      %p52 = scmp.ne.s32.totalorder %s40, %s41
      %p53 = scmp.eq.s32.totalorder %s15, 1
      %p54 = por %p52, %p53
      %p56 = scmp.ne.s32.totalorder %s41, %s55
      %p57 = scmp.eq.s32.totalorder %s15, 0
      %p58 = por %p56, %p57
      %p59 = scmp.le.s32.totalorder 1, %s9
      %p60 = scmp.lt.s32.totalorder %s9, 3
      %p61 = pnand %p59, %p60
      %p62 = pneg %p61
      // Predicated region
      $region9: #{tpu_custom_call.1} parent=5 // pred_check
        _
      $region10: #{tpu_custom_call.1} parent=5 // pred_check_branch
        %64 = sbr.rel (%p61) target = $region12
      $region11: #{tpu_custom_call.1} parent=5 // pred_region
        %s65 = ssub.s32 %s9, 1
        // Predicated region
        $region13: #{tpu_custom_call.1} parent=11 // pred_check
          %p66 = pneg %p30
        $region14: #{tpu_custom_call.1} parent=11 // pred_check_branch
          %68 = sbr.rel (%p66) target = $region16
        $region15: #{tpu_custom_call.1} parent=11 // pred_region
          %s70 = ssub.s32 128, 128
          %71 = vsyncadd [#allocation3], %s70
          %s73 = sshll.u32 [#allocation2], 4
          %s74 = int_to_ptr.vmem [resolvable:$true] %s73
          %76 = dma.hbm_to_vmem [thread:$0]  %s0, 128, %s74, [#allocation3]
        $region16: #{tpu_custom_call.1} parent=11 // pred_fallthru
          _
      $region12: #{tpu_custom_call.1} parent=5 // pred_fallthru
        _
      %p77 = scmp.lt.s32.totalorder %s9, 2
      // Predicated region
      $region17: #{tpu_custom_call.1} parent=5 // pred_check
        %p78 = pneg %p77
      $region18: #{tpu_custom_call.1} parent=5 // pred_check_branch
        %80 = sbr.rel (%p78) target = $region20
      $region19: #{tpu_custom_call.1} parent=5 // pred_region
        _
      $region20: #{tpu_custom_call.1} parent=5 // pred_fallthru
        _
      %p81 = scmp.le.s32.totalorder 1, %s9
      %p82 = scmp.lt.s32.totalorder %s9, 3
      %p83 = pnand %p81, %p82
      %p84 = pneg %p83
      // Predicated region
      $region21: #{tpu_custom_call.1} parent=5 // pred_check
        _
      $region22: #{tpu_custom_call.1} parent=5 // pred_check_branch
        %86 = sbr.rel (%p83) target = $region24
      $region23: #{tpu_custom_call.1} parent=5 // pred_region
        %s87 = ssub.s32 %s9, 1
        // Predicated region
        $region25: #{tpu_custom_call.1} parent=23 // pred_check
          %p88 = pneg %p30
        $region26: #{tpu_custom_call.1} parent=23 // pred_check_branch
          %90 = sbr.rel (%p88) target = $region28
        $region27: #{tpu_custom_call.1} parent=23 // pred_region
          %91 = dma.done [#allocation3], 128
        $region28: #{tpu_custom_call.1} parent=23 // pred_fallthru
          _
        %p92 = pneg %p30
        %p93 = pneg %p27
        %p94 = pneg %p51
        %p95 = pneg %p48
        %v96 = vld [vmem:[#allocation2] sm:$0xff]
        %97 = vst [vmem:[#allocation5] sm:$0xff] %v96
        // Predicated region
        $region29: #{tpu_custom_call.1} parent=23 // pred_check
          %p98 = pneg %p48
        $region30: #{tpu_custom_call.1} parent=23 // pred_check_branch
          %100 = sbr.rel (%p98) target = $region32
        $region31: #{tpu_custom_call.1} parent=23 // pred_region
          %s102 = ssub.s32 128, 128
          %103 = vsyncadd [#allocation4], %s102
          %s105 = sshll.u32 [#allocation5], 4
          %s106 = int_to_ptr.vmem [resolvable:$true] %s105
          %108 = dma.vmem_to_hbm [thread:$0]  %s106, 128, %s1, [#allocation4]
        $region32: #{tpu_custom_call.1} parent=23 // pred_fallthru
          _
        // Predicated region
        $region33: #{tpu_custom_call.1} parent=23 // pred_check
          %p109 = pneg %p48
        $region34: #{tpu_custom_call.1} parent=23 // pred_check_branch
          %111 = sbr.rel (%p109) target = $region36
        $region35: #{tpu_custom_call.1} parent=23 // pred_region
          %112 = dma.done [#allocation4], 128
        $region36: #{tpu_custom_call.1} parent=23 // pred_fallthru
          _
      $region24: #{tpu_custom_call.1} parent=5 // pred_fallthru
        _
      %p113 = scmp.le.s32.totalorder 2, %s9
      // Predicated region
      $region37: #{tpu_custom_call.1} parent=5 // pred_check
        %p114 = pneg %p113
      $region38: #{tpu_custom_call.1} parent=5 // pred_check_branch
        %116 = sbr.rel (%p114) target = $region40
      $region39: #{tpu_custom_call.1} parent=5 // pred_region
        %s117 = ssub.s32 %s9, 2
      $region40: #{tpu_custom_call.1} parent=5 // pred_fallthru
        _
    $region6: #{tpu_custom_call.1} parent=1 // loop_footer
      %s13 = sadd.s32 1, %s9
    $region7: #{tpu_custom_call.1} parent=1 // loop_footer_branch
      %8 = sbr.rel target = $region3
    $region8: #{tpu_custom_call.1} parent=1 // loop_exit
      _
    %118 = vsyncpa [#allocation3], 1
    %s119 = scalar_lea.sflag [#allocation3], 1
    %120 = vsyncpa %s119, 1
    %121 = vsyncpa [#allocation4], 1
    %s122 = scalar_lea.sflag [#allocation4], 1
    %123 = vsyncpa %s122, 1

// kernel: tpu_custom_call.1
$region0: #{tpu_custom_call.1}
  #allocation0 [shape = 'u32[]', space=smem, size = 0x4, offset = 0x4, fixed_abs, tag = 'smem constant byte address 0x4 - core index']
  #allocation1 [shape = 'u32[144,128]{1,0:T(1,128)}', space=vmem, size = 0x12000, scoped, tag = 'internal scratch']
  %s0 = inlined_call_operand.vmem [shape: f32[10,128], index: 0, kind: input, shape index: {}]
  %s1 = inlined_call_operand.vmem [shape: f32[32,10], index: 1, kind: input, shape index: {}]
  %s2 = inlined_call_operand.vmem [shape: f32[32,1], index: 2, kind: input, shape index: {}]
  %s3 = inlined_call_operand.vmem [shape: f32[32,32], index: 3, kind: input, shape index: {}]
  %s4 = inlined_call_operand.vmem [shape: f32[32,1], index: 4, kind: input, shape index: {}]
  %s5 = inlined_call_operand.vmem [shape: f32[32,32], index: 5, kind: input, shape index: {}]
  %s6 = inlined_call_operand.vmem [shape: f32[32,1], index: 6, kind: input, shape index: {}]
  %s7 = inlined_call_operand.vmem [shape: f32[32,32], index: 7, kind: input, shape index: {}]
  %s8 = inlined_call_operand.vmem [shape: f32[32,1], index: 8, kind: input, shape index: {}]
  %s9 = inlined_call_operand.vmem [shape: f32[15,32], index: 9, kind: input, shape index: {}]
  %s10 = inlined_call_operand.vmem [shape: f32[15,1], index: 10, kind: input, shape index: {}]
  %s11 = inlined_call_operand.hbm [shape: f32[15,128], index: 11, kind: output, shape index: {}]
  %s12 = sld [smem:[#allocation0]]
  $region54: #{tpu_custom_call.1} parent=0
    _
  %s14 = ssub.s32 1, %s12
  %s15 = scalar_select 0, %s14, %s12
  $region1: #{tpu_custom_call.1} parent=0
    #allocation2 [shape = 'u8[8192]{0}', space=vmem, size = 0x2000, scoped, tag = 'output window, operand 0, single buffered']
    #allocation3 [shape = 's32[1]{0}', space=sflag, size = 0x4, scoped, tag = 'scoped memory for tpu_custom_call.1']
    %16 = vsyncpa [#allocation3], 0
    // Predicated region
    $region2: #{tpu_custom_call.1} parent=1 // pred_check
      _
    $region3: #{tpu_custom_call.1} parent=1 // pred_check_branch
      %18 = sbr.rel (0) target = $region5
    $region4: #{tpu_custom_call.1} parent=1 // pred_region
      _
    $region5: #{tpu_custom_call.1} parent=1 // pred_fallthru
      _
    // Predicated region
    $region6: #{tpu_custom_call.1} parent=1 // pred_check
      _
    $region7: #{tpu_custom_call.1} parent=1 // pred_check_branch
      %20 = sbr.rel (0) target = $region9
    $region8: #{tpu_custom_call.1} parent=1 // pred_region
      _
    $region9: #{tpu_custom_call.1} parent=1 // pred_fallthru
      _
    // Predicated region
    $region10: #{tpu_custom_call.1} parent=1 // pred_check
      _
    $region11: #{tpu_custom_call.1} parent=1 // pred_check_branch
      %22 = sbr.rel (0) target = $region13
    $region12: #{tpu_custom_call.1} parent=1 // pred_region
      _
    $region13: #{tpu_custom_call.1} parent=1 // pred_fallthru
      _
    // Predicated region
    $region14: #{tpu_custom_call.1} parent=1 // pred_check
      _
    $region15: #{tpu_custom_call.1} parent=1 // pred_check_branch
      %24 = sbr.rel (0) target = $region17
    $region16: #{tpu_custom_call.1} parent=1 // pred_region
      _
    $region17: #{tpu_custom_call.1} parent=1 // pred_fallthru
      _
    // Predicated region
    $region18: #{tpu_custom_call.1} parent=1 // pred_check
      _
    $region19: #{tpu_custom_call.1} parent=1 // pred_check_branch
      %26 = sbr.rel (0) target = $region21
    $region20: #{tpu_custom_call.1} parent=1 // pred_region
      _
    $region21: #{tpu_custom_call.1} parent=1 // pred_fallthru
      _
    // Predicated region
    $region22: #{tpu_custom_call.1} parent=1 // pred_check
      _
    $region23: #{tpu_custom_call.1} parent=1 // pred_check_branch
      %28 = sbr.rel (0) target = $region25
    $region24: #{tpu_custom_call.1} parent=1 // pred_region
      _
    $region25: #{tpu_custom_call.1} parent=1 // pred_fallthru
      _
    // Predicated region
    $region26: #{tpu_custom_call.1} parent=1 // pred_check
      _
    $region27: #{tpu_custom_call.1} parent=1 // pred_check_branch
      %30 = sbr.rel (0) target = $region29
    $region28: #{tpu_custom_call.1} parent=1 // pred_region
      _
    $region29: #{tpu_custom_call.1} parent=1 // pred_fallthru
      _
    // Predicated region
    $region30: #{tpu_custom_call.1} parent=1 // pred_check
      _
    $region31: #{tpu_custom_call.1} parent=1 // pred_check_branch
      %32 = sbr.rel (0) target = $region33
    $region32: #{tpu_custom_call.1} parent=1 // pred_region
      _
    $region33: #{tpu_custom_call.1} parent=1 // pred_fallthru
      _
    // Predicated region
    $region34: #{tpu_custom_call.1} parent=1 // pred_check
      _
    $region35: #{tpu_custom_call.1} parent=1 // pred_check_branch
      %34 = sbr.rel (0) target = $region37
    $region36: #{tpu_custom_call.1} parent=1 // pred_region
      _
    $region37: #{tpu_custom_call.1} parent=1 // pred_fallthru
      _
    // Predicated region
    $region38: #{tpu_custom_call.1} parent=1 // pred_check
      _
    $region39: #{tpu_custom_call.1} parent=1 // pred_check_branch
      %36 = sbr.rel (0) target = $region41
    $region40: #{tpu_custom_call.1} parent=1 // pred_region
      _
    $region41: #{tpu_custom_call.1} parent=1 // pred_fallthru
      _
    // Predicated region
    $region42: #{tpu_custom_call.1} parent=1 // pred_check
      _
    $region43: #{tpu_custom_call.1} parent=1 // pred_check_branch
      %38 = sbr.rel (0) target = $region45
    $region44: #{tpu_custom_call.1} parent=1 // pred_region
      _
    $region45: #{tpu_custom_call.1} parent=1 // pred_fallthru
      _
    %v39 = vld [vmem:[%s0] sm:$0xff]
    %v40 = vld [vmem:[%s0 + $0x8] sm:$0x3]
    %v41 = vld [vmem:[%s1] sm:$0xff]
    %v42 = vld [vmem:[%s1 + $0x8] sm:$0xff]
    %v43 = vld [vmem:[%s1 + $0x10] sm:$0xff]
    %v44 = vld [vmem:[%s1 + $0x18] sm:$0xff]
    %v45 = vld [vmem:[%s2] sm:$0xff]
    %v46 = vld [vmem:[%s2 + $0x8] sm:$0xff]
    %v47 = vld [vmem:[%s2 + $0x10] sm:$0xff]
    %v48 = vld [vmem:[%s2 + $0x18] sm:$0xff]
    %50 = vset.pattern.permute.xlu0 0
    %51 = vperm.xlu0 %50, %v45
    %v52 = vpop.permute.xlu0 %51
    %55 = vset.pattern.permute.xlu0 0
    %56 = vperm.xlu0 %55, %v46
    %v57 = vpop.permute.xlu0 %56
    %60 = vset.pattern.permute.xlu0 0
    %61 = vperm.xlu0 %60, %v47
    %v62 = vpop.permute.xlu0 %61
    %65 = vset.pattern.permute.xlu0 0
    %66 = vperm.xlu0 %65, %v48
    %v67 = vpop.permute.xlu0 %66
    %vm69 = vcmask 80896
    %v71 = vsel %vm69, %v41, 0
    %v74 = vsel %vm69, %v42, 0
    %v77 = vsel %vm69, %v43, 0
    %v80 = vsel %vm69, %v44, 0
    %vm82 = vcmask 1041408
    %v84 = vsel %vm82, %v40, 0
    %86 = vmatprep.subr.mxu0 0.0
    %87 = vmatpush1.msra.mxu0 %v39
    %88 = vmatprep.subr.mxu0 0.0
    %89 = vmatpush1.msra.mxu0 %v84
    %90 = vmatprep.subr.mxu0 0.0
    %91 = vmatpush1.msra.mxu0 0.0
    %92 = vmatprep.subr.mxu0 0.0
    %93 = vmatpush1.msra.mxu0 0.0
    %94 = vmatprep.subr.mxu0 0.0
    %95 = vmatpush1.msra.mxu0 0.0
    %96 = vmatprep.subr.mxu0 0.0
    %97 = vmatpush1.msra.mxu0 0.0
    %98 = vmatprep.subr.mxu0 0.0
    %99 = vmatpush1.msra.mxu0 0.0
    %100 = vmatprep.subr.mxu0 0.0
    %101 = vmatpush1.msra.mxu0 0.0
    %102 = vmatprep.subr.mxu0 0.0
    %103 = vmatpush1.msra.mxu0 0.0
    %104 = vmatprep.subr.mxu0 0.0
    %105 = vmatpush1.msra.mxu0 0.0
    %106 = vmatprep.subr.mxu0 0.0
    %107 = vmatpush1.msra.mxu0 0.0
    %108 = vmatprep.subr.mxu0 0.0
    %109 = vmatpush1.msra.mxu0 0.0
    %110 = vmatprep.subr.mxu0 0.0
    %111 = vmatpush1.msra.mxu0 0.0
    %112 = vmatprep.subr.mxu0 0.0
    %113 = vmatpush1.msra.mxu0 0.0
    %114 = vmatprep.subr.mxu0 0.0
    %115 = vmatpush1.msra.mxu0 0.0
    %116 = vmatprep.subr.mxu0 0.0
    %117 = vmatpush1.msra.mxu0 0.0
    %118 = vmatprep.subr.mxu0 0.0
    %119 = vmatpush1.msra.mxu0 0.0
    %120 = vmatprep.subr.mxu0 0.0
    %121 = vmatpush1.msra.mxu0 0.0
    %122 = vmatprep.subr.mxu0 0.0
    %123 = vmatpush1.msra.mxu0 0.0
    %124 = vmatprep.subr.mxu0 0.0
    %125 = vmatpush1.msra.mxu0 0.0
    %126 = vmatprep.subr.mxu0 0.0
    %127 = vmatpush1.msra.mxu0 0.0
    %128 = vmatprep.subr.mxu0 0.0
    %129 = vmatpush1.msra.mxu0 0.0
    %130 = vmatprep.subr.mxu0 0.0
    %131 = vmatpush1.msra.mxu0 0.0
    %132 = vmatprep.subr.mxu0 0.0
    %133 = vmatpush1.msra.mxu0 0.0
    %134 = vmatprep.subr.mxu0 0.0
    %135 = vmatpush1.msra.mxu0 0.0
    %136 = vmatprep.subr.mxu0 0.0
    %137 = vmatpush1.msra.mxu0 0.0
    %138 = vmatprep.subr.mxu0 0.0
    %139 = vmatpush1.msra.mxu0 0.0
    %140 = vmatprep.subr.mxu0 0.0
    %141 = vmatpush1.msra.mxu0 0.0
    %142 = vmatprep.subr.mxu0 0.0
    %143 = vmatpush1.msra.mxu0 0.0
    %144 = vmatprep.subr.mxu0 0.0
    %145 = vmatpush1.msra.mxu0 0.0
    %146 = vmatprep.subr.mxu0 0.0
    %147 = vmatpush1.msra.mxu0 0.0
    %148 = vmatprep.subr.mxu0 0.0
    %149 = vmatpush1.msra.mxu0 0.0
    %150 = vmatprep.mubr.f32.mxu0 0.0
    %151 = vmatmul.mubr.f32.gmra.mrb[0].mxu0 %v71
    %v152 = vpop.f32.mrb[0].mxu0
    %v153 = vadd.f32 %v52, %v152
    %v154 = vpop.f32.mrb[0].mxu0
    %155 = vmatprep.mubr.f32.mxu0 0.0
    %156 = vmatmul.mubr.f32.gmra.mrb[0].mxu0 %v74
    %v157 = vpop.f32.mrb[0].mxu0
    %v158 = vadd.f32 %v57, %v157
    %v159 = vpop.f32.mrb[0].mxu0
    %160 = vmatprep.mubr.f32.mxu0 0.0
    %161 = vmatmul.mubr.f32.gmra.mrb[0].mxu0 %v77
    %v162 = vpop.f32.mrb[0].mxu0
    %v163 = vadd.f32 %v62, %v162
    %v164 = vpop.f32.mrb[0].mxu0
    %165 = vmatprep.mubr.f32.mxu0 0.0
    %166 = vmatmul.mubr.f32.gmra.mrb[0].mxu0 %v80
    %v167 = vpop.f32.mrb[0].mxu0
    %v168 = vadd.f32 %v67, %v167
    %v169 = vpop.f32.mrb[0].mxu0
    %170 = vdwg.mxu0
    %v171 = vmax.f32 %v153, 0.0
    %v172 = vmax.f32 %v158, 0.0
    %v173 = vmax.f32 %v163, 0.0
    %v174 = vmax.f32 %v168, 0.0
    %v175 = vld [vmem:[%s3] sm:$0xff]
    %v176 = vld [vmem:[%s3 + $0x8] sm:$0xff]
    %v177 = vld [vmem:[%s3 + $0x10] sm:$0xff]
    %v178 = vld [vmem:[%s3 + $0x18] sm:$0xff]
    %v179 = vld [vmem:[%s4] sm:$0xff]
    %v180 = vld [vmem:[%s4 + $0x8] sm:$0xff]
    %v181 = vld [vmem:[%s4 + $0x10] sm:$0xff]
    %v182 = vld [vmem:[%s4 + $0x18] sm:$0xff]
    %184 = vset.pattern.permute.xlu0 0
    %185 = vperm.xlu0 %184, %v179
    %v186 = vpop.permute.xlu0 %185
    %189 = vset.pattern.permute.xlu0 0
    %190 = vperm.xlu0 %189, %v180
    %v191 = vpop.permute.xlu0 %190
    %194 = vset.pattern.permute.xlu0 0
    %195 = vperm.xlu0 %194, %v181
    %v196 = vpop.permute.xlu0 %195
    %199 = vset.pattern.permute.xlu0 0
    %200 = vperm.xlu0 %199, %v182
    %v201 = vpop.permute.xlu0 %200
    %vm203 = vcmask 261120
    %v205 = vsel %vm203, %v175, 0
    %v208 = vsel %vm203, %v176, 0
    %v211 = vsel %vm203, %v177, 0
    %v214 = vsel %vm203, %v178, 0
    %216 = vmatprep.subr.mxu0 0.0
    %217 = vmatpush1.msra.mxu0 %v171
    %218 = vmatprep.subr.mxu0 0.0
    %219 = vmatpush1.msra.mxu0 %v172
    %220 = vmatprep.subr.mxu0 0.0
    %221 = vmatpush1.msra.mxu0 %v173
    %222 = vmatprep.subr.mxu0 0.0
    %223 = vmatpush1.msra.mxu0 %v174
    %224 = vmatprep.subr.mxu0 0.0
    %225 = vmatpush1.msra.mxu0 0.0
    %226 = vmatprep.subr.mxu0 0.0
    %227 = vmatpush1.msra.mxu0 0.0
    %228 = vmatprep.subr.mxu0 0.0
    %229 = vmatpush1.msra.mxu0 0.0
    %230 = vmatprep.subr.mxu0 0.0
    %231 = vmatpush1.msra.mxu0 0.0
    %232 = vmatprep.subr.mxu0 0.0
    %233 = vmatpush1.msra.mxu0 0.0
    %234 = vmatprep.subr.mxu0 0.0
    %235 = vmatpush1.msra.mxu0 0.0
    %236 = vmatprep.subr.mxu0 0.0
    %237 = vmatpush1.msra.mxu0 0.0
    %238 = vmatprep.subr.mxu0 0.0
    %239 = vmatpush1.msra.mxu0 0.0
    %240 = vmatprep.subr.mxu0 0.0
    %241 = vmatpush1.msra.mxu0 0.0
    %242 = vmatprep.subr.mxu0 0.0
    %243 = vmatpush1.msra.mxu0 0.0
    %244 = vmatprep.subr.mxu0 0.0
    %245 = vmatpush1.msra.mxu0 0.0
    %246 = vmatprep.subr.mxu0 0.0
    %247 = vmatpush1.msra.mxu0 0.0
    %248 = vmatprep.subr.mxu0 0.0
    %249 = vmatpush1.msra.mxu0 0.0
    %250 = vmatprep.subr.mxu0 0.0
    %251 = vmatpush1.msra.mxu0 0.0
    %252 = vmatprep.subr.mxu0 0.0
    %253 = vmatpush1.msra.mxu0 0.0
    %254 = vmatprep.subr.mxu0 0.0
    %255 = vmatpush1.msra.mxu0 0.0
    %256 = vmatprep.subr.mxu0 0.0
    %257 = vmatpush1.msra.mxu0 0.0
    %258 = vmatprep.subr.mxu0 0.0
    %259 = vmatpush1.msra.mxu0 0.0
    %260 = vmatprep.subr.mxu0 0.0
    %261 = vmatpush1.msra.mxu0 0.0
    %262 = vmatprep.subr.mxu0 0.0
    %263 = vmatpush1.msra.mxu0 0.0
    %264 = vmatprep.subr.mxu0 0.0
    %265 = vmatpush1.msra.mxu0 0.0
    %266 = vmatprep.subr.mxu0 0.0
    %267 = vmatpush1.msra.mxu0 0.0
    %268 = vmatprep.subr.mxu0 0.0
    %269 = vmatpush1.msra.mxu0 0.0
    %270 = vmatprep.subr.mxu0 0.0
    %271 = vmatpush1.msra.mxu0 0.0
    %272 = vmatprep.subr.mxu0 0.0
    %273 = vmatpush1.msra.mxu0 0.0
    %274 = vmatprep.subr.mxu0 0.0
    %275 = vmatpush1.msra.mxu0 0.0
    %276 = vmatprep.subr.mxu0 0.0
    %277 = vmatpush1.msra.mxu0 0.0
    %278 = vmatprep.subr.mxu0 0.0
    %279 = vmatpush1.msra.mxu0 0.0
    %280 = vmatprep.mubr.f32.mxu0 0.0
    %281 = vmatmul.mubr.f32.gmra.mrb[0].mxu0 %v205
    %v282 = vpop.f32.mrb[0].mxu0
    %v283 = vadd.f32 %v186, %v282
    %v284 = vpop.f32.mrb[0].mxu0
    %285 = vmatprep.mubr.f32.mxu0 0.0
    %286 = vmatmul.mubr.f32.gmra.mrb[0].mxu0 %v208
    %v287 = vpop.f32.mrb[0].mxu0
    %v288 = vadd.f32 %v191, %v287
    %v289 = vpop.f32.mrb[0].mxu0
    %290 = vmatprep.mubr.f32.mxu0 0.0
    %291 = vmatmul.mubr.f32.gmra.mrb[0].mxu0 %v211
    %v292 = vpop.f32.mrb[0].mxu0
    %v293 = vadd.f32 %v196, %v292
    %v294 = vpop.f32.mrb[0].mxu0
    %295 = vmatprep.mubr.f32.mxu0 0.0
    %296 = vmatmul.mubr.f32.gmra.mrb[0].mxu0 %v214
    %v297 = vpop.f32.mrb[0].mxu0
    %v298 = vadd.f32 %v201, %v297
    %v299 = vpop.f32.mrb[0].mxu0
    %300 = vdwg.mxu0
    %v301 = vmax.f32 %v283, 0.0
    %v302 = vmax.f32 %v288, 0.0
    %v303 = vmax.f32 %v293, 0.0
    %v304 = vmax.f32 %v298, 0.0
    %v305 = vld [vmem:[%s5] sm:$0xff]
    %v306 = vld [vmem:[%s5 + $0x8] sm:$0xff]
    %v307 = vld [vmem:[%s5 + $0x10] sm:$0xff]
    %v308 = vld [vmem:[%s5 + $0x18] sm:$0xff]
    %v309 = vld [vmem:[%s6] sm:$0xff]
    %v310 = vld [vmem:[%s6 + $0x8] sm:$0xff]
    %v311 = vld [vmem:[%s6 + $0x10] sm:$0xff]
    %v312 = vld [vmem:[%s6 + $0x18] sm:$0xff]
    %314 = vset.pattern.permute.xlu0 0
    %315 = vperm.xlu0 %314, %v309
    %v316 = vpop.permute.xlu0 %315
    %319 = vset.pattern.permute.xlu0 0
    %320 = vperm.xlu0 %319, %v310
    %v321 = vpop.permute.xlu0 %320
    %324 = vset.pattern.permute.xlu0 0
    %325 = vperm.xlu0 %324, %v311
    %v326 = vpop.permute.xlu0 %325
    %329 = vset.pattern.permute.xlu0 0
    %330 = vperm.xlu0 %329, %v312
    %v331 = vpop.permute.xlu0 %330
    %v334 = vsel %vm203, %v305, 0
    %v337 = vsel %vm203, %v306, 0
    %v340 = vsel %vm203, %v307, 0
    %v343 = vsel %vm203, %v308, 0
    %345 = vmatprep.subr.mxu0 0.0
    %346 = vmatpush1.msra.mxu0 %v301
    %347 = vmatprep.subr.mxu0 0.0
    %348 = vmatpush1.msra.mxu0 %v302
    %349 = vmatprep.subr.mxu0 0.0
    %350 = vmatpush1.msra.mxu0 %v303
    %351 = vmatprep.subr.mxu0 0.0
    %352 = vmatpush1.msra.mxu0 %v304
    %353 = vmatprep.subr.mxu0 0.0
    %354 = vmatpush1.msra.mxu0 0.0
    %355 = vmatprep.subr.mxu0 0.0
    %356 = vmatpush1.msra.mxu0 0.0
    %357 = vmatprep.subr.mxu0 0.0
    %358 = vmatpush1.msra.mxu0 0.0
    %359 = vmatprep.subr.mxu0 0.0
    %360 = vmatpush1.msra.mxu0 0.0
    %361 = vmatprep.subr.mxu0 0.0
    %362 = vmatpush1.msra.mxu0 0.0
    %363 = vmatprep.subr.mxu0 0.0
    %364 = vmatpush1.msra.mxu0 0.0
    %365 = vmatprep.subr.mxu0 0.0
    %366 = vmatpush1.msra.mxu0 0.0
    %367 = vmatprep.subr.mxu0 0.0
    %368 = vmatpush1.msra.mxu0 0.0
    %369 = vmatprep.subr.mxu0 0.0
    %370 = vmatpush1.msra.mxu0 0.0
    %371 = vmatprep.subr.mxu0 0.0
    %372 = vmatpush1.msra.mxu0 0.0
    %373 = vmatprep.subr.mxu0 0.0
    %374 = vmatpush1.msra.mxu0 0.0
    %375 = vmatprep.subr.mxu0 0.0
    %376 = vmatpush1.msra.mxu0 0.0
    %377 = vmatprep.subr.mxu0 0.0
    %378 = vmatpush1.msra.mxu0 0.0
    %379 = vmatprep.subr.mxu0 0.0
    %380 = vmatpush1.msra.mxu0 0.0
    %381 = vmatprep.subr.mxu0 0.0
    %382 = vmatpush1.msra.mxu0 0.0
    %383 = vmatprep.subr.mxu0 0.0
    %384 = vmatpush1.msra.mxu0 0.0
    %385 = vmatprep.subr.mxu0 0.0
    %386 = vmatpush1.msra.mxu0 0.0
    %387 = vmatprep.subr.mxu0 0.0
    %388 = vmatpush1.msra.mxu0 0.0
    %389 = vmatprep.subr.mxu0 0.0
    %390 = vmatpush1.msra.mxu0 0.0
    %391 = vmatprep.subr.mxu0 0.0
    %392 = vmatpush1.msra.mxu0 0.0
    %393 = vmatprep.subr.mxu0 0.0
    %394 = vmatpush1.msra.mxu0 0.0
    %395 = vmatprep.subr.mxu0 0.0
    %396 = vmatpush1.msra.mxu0 0.0
    %397 = vmatprep.subr.mxu0 0.0
    %398 = vmatpush1.msra.mxu0 0.0
    %399 = vmatprep.subr.mxu0 0.0
    %400 = vmatpush1.msra.mxu0 0.0
    %401 = vmatprep.subr.mxu0 0.0
    %402 = vmatpush1.msra.mxu0 0.0
    %403 = vmatprep.subr.mxu0 0.0
    %404 = vmatpush1.msra.mxu0 0.0
    %405 = vmatprep.subr.mxu0 0.0
    %406 = vmatpush1.msra.mxu0 0.0
    %407 = vmatprep.subr.mxu0 0.0
    %408 = vmatpush1.msra.mxu0 0.0
    %409 = vmatprep.mubr.f32.mxu0 0.0
    %410 = vmatmul.mubr.f32.gmra.mrb[0].mxu0 %v334
    %v411 = vpop.f32.mrb[0].mxu0
    %v412 = vadd.f32 %v316, %v411
    %v413 = vpop.f32.mrb[0].mxu0
    %414 = vmatprep.mubr.f32.mxu0 0.0
    %415 = vmatmul.mubr.f32.gmra.mrb[0].mxu0 %v337
    %v416 = vpop.f32.mrb[0].mxu0
    %v417 = vadd.f32 %v321, %v416
    %v418 = vpop.f32.mrb[0].mxu0
    %419 = vmatprep.mubr.f32.mxu0 0.0
    %420 = vmatmul.mubr.f32.gmra.mrb[0].mxu0 %v340
    %v421 = vpop.f32.mrb[0].mxu0
    %v422 = vadd.f32 %v326, %v421
    %v423 = vpop.f32.mrb[0].mxu0
    %424 = vmatprep.mubr.f32.mxu0 0.0
    %425 = vmatmul.mubr.f32.gmra.mrb[0].mxu0 %v343
    %v426 = vpop.f32.mrb[0].mxu0
    %v427 = vadd.f32 %v331, %v426
    %v428 = vpop.f32.mrb[0].mxu0
    %429 = vdwg.mxu0
    %v430 = vmax.f32 %v412, 0.0
    %v431 = vmax.f32 %v417, 0.0
    %v432 = vmax.f32 %v422, 0.0
    %v433 = vmax.f32 %v427, 0.0
    %v434 = vld [vmem:[%s7] sm:$0xff]
    %v435 = vld [vmem:[%s7 + $0x8] sm:$0xff]
    %v436 = vld [vmem:[%s7 + $0x10] sm:$0xff]
    %v437 = vld [vmem:[%s7 + $0x18] sm:$0xff]
    %v438 = vld [vmem:[%s8] sm:$0xff]
    %v439 = vld [vmem:[%s8 + $0x8] sm:$0xff]
    %v440 = vld [vmem:[%s8 + $0x10] sm:$0xff]
    %v441 = vld [vmem:[%s8 + $0x18] sm:$0xff]
    %443 = vset.pattern.permute.xlu0 0
    %444 = vperm.xlu0 %443, %v438
    %v445 = vpop.permute.xlu0 %444
    %448 = vset.pattern.permute.xlu0 0
    %449 = vperm.xlu0 %448, %v439
    %v450 = vpop.permute.xlu0 %449
    %453 = vset.pattern.permute.xlu0 0
    %454 = vperm.xlu0 %453, %v440
    %v455 = vpop.permute.xlu0 %454
    %458 = vset.pattern.permute.xlu0 0
    %459 = vperm.xlu0 %458, %v441
    %v460 = vpop.permute.xlu0 %459
    %v463 = vsel %vm203, %v434, 0
    %v466 = vsel %vm203, %v435, 0
    %v469 = vsel %vm203, %v436, 0
    %v472 = vsel %vm203, %v437, 0
    %474 = vmatprep.subr.mxu0 0.0
    %475 = vmatpush1.msra.mxu0 %v430
    %476 = vmatprep.subr.mxu0 0.0
    %477 = vmatpush1.msra.mxu0 %v431
    %478 = vmatprep.subr.mxu0 0.0
    %479 = vmatpush1.msra.mxu0 %v432
    %480 = vmatprep.subr.mxu0 0.0
    %481 = vmatpush1.msra.mxu0 %v433
    %482 = vmatprep.subr.mxu0 0.0
    %483 = vmatpush1.msra.mxu0 0.0
    %484 = vmatprep.subr.mxu0 0.0
    %485 = vmatpush1.msra.mxu0 0.0
    %486 = vmatprep.subr.mxu0 0.0
    %487 = vmatpush1.msra.mxu0 0.0
    %488 = vmatprep.subr.mxu0 0.0
    %489 = vmatpush1.msra.mxu0 0.0
    %490 = vmatprep.subr.mxu0 0.0
    %491 = vmatpush1.msra.mxu0 0.0
    %492 = vmatprep.subr.mxu0 0.0
    %493 = vmatpush1.msra.mxu0 0.0
    %494 = vmatprep.subr.mxu0 0.0
    %495 = vmatpush1.msra.mxu0 0.0
    %496 = vmatprep.subr.mxu0 0.0
    %497 = vmatpush1.msra.mxu0 0.0
    %498 = vmatprep.subr.mxu0 0.0
    %499 = vmatpush1.msra.mxu0 0.0
    %500 = vmatprep.subr.mxu0 0.0
    %501 = vmatpush1.msra.mxu0 0.0
    %502 = vmatprep.subr.mxu0 0.0
    %503 = vmatpush1.msra.mxu0 0.0
    %504 = vmatprep.subr.mxu0 0.0
    %505 = vmatpush1.msra.mxu0 0.0
    %506 = vmatprep.subr.mxu0 0.0
    %507 = vmatpush1.msra.mxu0 0.0
    %508 = vmatprep.subr.mxu0 0.0
    %509 = vmatpush1.msra.mxu0 0.0
    %510 = vmatprep.subr.mxu0 0.0
    %511 = vmatpush1.msra.mxu0 0.0
    %512 = vmatprep.subr.mxu0 0.0
    %513 = vmatpush1.msra.mxu0 0.0
    %514 = vmatprep.subr.mxu0 0.0
    %515 = vmatpush1.msra.mxu0 0.0
    %516 = vmatprep.subr.mxu0 0.0
    %517 = vmatpush1.msra.mxu0 0.0
    %518 = vmatprep.subr.mxu0 0.0
    %519 = vmatpush1.msra.mxu0 0.0
    %520 = vmatprep.subr.mxu0 0.0
    %521 = vmatpush1.msra.mxu0 0.0
    %522 = vmatprep.subr.mxu0 0.0
    %523 = vmatpush1.msra.mxu0 0.0
    %524 = vmatprep.subr.mxu0 0.0
    %525 = vmatpush1.msra.mxu0 0.0
    %526 = vmatprep.subr.mxu0 0.0
    %527 = vmatpush1.msra.mxu0 0.0
    %528 = vmatprep.subr.mxu0 0.0
    %529 = vmatpush1.msra.mxu0 0.0
    %530 = vmatprep.subr.mxu0 0.0
    %531 = vmatpush1.msra.mxu0 0.0
    %532 = vmatprep.subr.mxu0 0.0
    %533 = vmatpush1.msra.mxu0 0.0
    %534 = vmatprep.subr.mxu0 0.0
    %535 = vmatpush1.msra.mxu0 0.0
    %536 = vmatprep.subr.mxu0 0.0
    %537 = vmatpush1.msra.mxu0 0.0
    %538 = vmatprep.mubr.f32.mxu0 0.0
    %539 = vmatmul.mubr.f32.gmra.mrb[0].mxu0 %v463
    %v540 = vpop.f32.mrb[0].mxu0
    %v541 = vadd.f32 %v445, %v540
    %v542 = vpop.f32.mrb[0].mxu0
    %543 = vmatprep.mubr.f32.mxu0 0.0
    %544 = vmatmul.mubr.f32.gmra.mrb[0].mxu0 %v466
    %v545 = vpop.f32.mrb[0].mxu0
    %v546 = vadd.f32 %v450, %v545
    %v547 = vpop.f32.mrb[0].mxu0
    %548 = vmatprep.mubr.f32.mxu0 0.0
    %549 = vmatmul.mubr.f32.gmra.mrb[0].mxu0 %v469
    %v550 = vpop.f32.mrb[0].mxu0
    %v551 = vadd.f32 %v455, %v550
    %v552 = vpop.f32.mrb[0].mxu0
    %553 = vmatprep.mubr.f32.mxu0 0.0
    %554 = vmatmul.mubr.f32.gmra.mrb[0].mxu0 %v472
    %v555 = vpop.f32.mrb[0].mxu0
    %v556 = vadd.f32 %v460, %v555
    %v557 = vpop.f32.mrb[0].mxu0
    %558 = vdwg.mxu0
    %v559 = vmax.f32 %v541, 0.0
    %v560 = vmax.f32 %v546, 0.0
    %v561 = vmax.f32 %v551, 0.0
    %v562 = vmax.f32 %v556, 0.0
    %v563 = vld [vmem:[%s9] sm:$0xff]
    %v564 = vld [vmem:[%s9 + $0x8] sm:$0x7f]
    %v565 = vld [vmem:[%s10] sm:$0xff]
    %v566 = vld [vmem:[%s10 + $0x8] sm:$0x7f]
    %568 = vset.pattern.permute.xlu0 0
    %569 = vperm.xlu0 %568, %v565
    %v570 = vpop.permute.xlu0 %569
    %573 = vset.pattern.permute.xlu0 0
    %574 = vperm.xlu0 %573, %v566
    %v575 = vpop.permute.xlu0 %574
    %v578 = vsel %vm203, %v563, 0
    %v581 = vsel %vm203, %v564, 0
    %583 = vmatprep.subr.mxu0 0.0
    %584 = vmatpush1.msra.mxu0 %v559
    %585 = vmatprep.subr.mxu0 0.0
    %586 = vmatpush1.msra.mxu0 %v560
    %587 = vmatprep.subr.mxu0 0.0
    %588 = vmatpush1.msra.mxu0 %v561
    %589 = vmatprep.subr.mxu0 0.0
    %590 = vmatpush1.msra.mxu0 %v562
    %591 = vmatprep.subr.mxu0 0.0
    %592 = vmatpush1.msra.mxu0 0.0
    %593 = vmatprep.subr.mxu0 0.0
    %594 = vmatpush1.msra.mxu0 0.0
    %595 = vmatprep.subr.mxu0 0.0
    %596 = vmatpush1.msra.mxu0 0.0
    %597 = vmatprep.subr.mxu0 0.0
    %598 = vmatpush1.msra.mxu0 0.0
    %599 = vmatprep.subr.mxu0 0.0
    %600 = vmatpush1.msra.mxu0 0.0
    %601 = vmatprep.subr.mxu0 0.0
    %602 = vmatpush1.msra.mxu0 0.0
    %603 = vmatprep.subr.mxu0 0.0
    %604 = vmatpush1.msra.mxu0 0.0
    %605 = vmatprep.subr.mxu0 0.0
    %606 = vmatpush1.msra.mxu0 0.0
    %607 = vmatprep.subr.mxu0 0.0
    %608 = vmatpush1.msra.mxu0 0.0
    %609 = vmatprep.subr.mxu0 0.0
    %610 = vmatpush1.msra.mxu0 0.0
    %611 = vmatprep.subr.mxu0 0.0
    %612 = vmatpush1.msra.mxu0 0.0
    %613 = vmatprep.subr.mxu0 0.0
    %614 = vmatpush1.msra.mxu0 0.0
    %615 = vmatprep.subr.mxu0 0.0
    %616 = vmatpush1.msra.mxu0 0.0
    %617 = vmatprep.subr.mxu0 0.0
    %618 = vmatpush1.msra.mxu0 0.0
    %619 = vmatprep.subr.mxu0 0.0
    %620 = vmatpush1.msra.mxu0 0.0
    %621 = vmatprep.subr.mxu0 0.0
    %622 = vmatpush1.msra.mxu0 0.0
    %623 = vmatprep.subr.mxu0 0.0
    %624 = vmatpush1.msra.mxu0 0.0
    %625 = vmatprep.subr.mxu0 0.0
    %626 = vmatpush1.msra.mxu0 0.0
    %627 = vmatprep.subr.mxu0 0.0
    %628 = vmatpush1.msra.mxu0 0.0
    %629 = vmatprep.subr.mxu0 0.0
    %630 = vmatpush1.msra.mxu0 0.0
    %631 = vmatprep.subr.mxu0 0.0
    %632 = vmatpush1.msra.mxu0 0.0
    %633 = vmatprep.subr.mxu0 0.0
    %634 = vmatpush1.msra.mxu0 0.0
    %635 = vmatprep.subr.mxu0 0.0
    %636 = vmatpush1.msra.mxu0 0.0
    %637 = vmatprep.subr.mxu0 0.0
    %638 = vmatpush1.msra.mxu0 0.0
    %639 = vmatprep.subr.mxu0 0.0
    %640 = vmatpush1.msra.mxu0 0.0
    %641 = vmatprep.subr.mxu0 0.0
    %642 = vmatpush1.msra.mxu0 0.0
    %643 = vmatprep.subr.mxu0 0.0
    %644 = vmatpush1.msra.mxu0 0.0
    %645 = vmatprep.subr.mxu0 0.0
    %646 = vmatpush1.msra.mxu0 0.0
    %647 = vmatprep.mubr.f32.mxu0 0.0
    %648 = vmatmul.mubr.f32.gmra.mrb[0].mxu0 %v578
    %v649 = vpop.f32.mrb[0].mxu0
    %v650 = vadd.f32 %v570, %v649
    %v651 = vpop.f32.mrb[0].mxu0
    %652 = vmatprep.mubr.f32.mxu0 0.0
    %653 = vmatmul.mubr.f32.gmra.mrb[0].mxu0 %v581
    %v654 = vpop.f32.mrb[0].mxu0
    %v655 = vadd.f32 %v575, %v654
    %v656 = vpop.f32.mrb[0].mxu0
    %657 = vdwg.mxu0
    %658 = vst [vmem:[#allocation2] sm:$0xff] %v650
    %659 = vst [vmem:[#allocation2 + $0x8] sm:$0x7f] %v655
    // Predicated region
    $region46: #{tpu_custom_call.1} parent=1 // pred_check
      _
    $region47: #{tpu_custom_call.1} parent=1 // pred_check_branch
      %661 = sbr.rel (0) target = $region49
    $region48: #{tpu_custom_call.1} parent=1 // pred_region
      %s663 = ssub.s32 256, 256
      %664 = vsyncadd [#allocation3], %s663
      %s665 = sshll.u32 [#allocation2], 4
      %s666 = int_to_ptr.vmem [resolvable:$true] %s665
      %671 = dma.vmem_to_hbm [thread:$0]  %s666, 256, %s11, [#allocation3], 128, 128, 8
    $region49: #{tpu_custom_call.1} parent=1 // pred_fallthru
      _
    // Predicated region
    $region50: #{tpu_custom_call.1} parent=1 // pred_check
      _
    $region51: #{tpu_custom_call.1} parent=1 // pred_check_branch
      %673 = sbr.rel (0) target = $region53
    $region52: #{tpu_custom_call.1} parent=1 // pred_region
      %674 = dma.done [#allocation3], 256
    $region53: #{tpu_custom_call.1} parent=1 // pred_fallthru
      _
    %675 = vsyncpa [#allocation3], 1

</llo_original>
